<compile_context>
chip_gen: v5e
topology: v5e:2x2
jax: 0.10.0
libtpu: 0.0.40
codegen_flags: <defaults>
</compile_context>

<pallas_src>
import functools
import jax
import jax.numpy as jnp
from jax.experimental import pallas as pl
from jax.experimental.pallas import tpu as pltpu


def _round_up(v, m):
    return ((v + m - 1) // m) * m


def _phase_plan(in_size, k, s, d):
    """1-D sub-pixel decomposition of a transposed conv.

    Output index o = q*s + p (phase p) receives x[q + off - pad_before] * w[tap] for each
    tap kk with (kk*d) % s == p, where off = pad_before + (p - kk*d)//s >= 0 indexes a
    zero-padded input.  Returns (out_size, pad_before, padded_size, phases) with
    phases[p] = (num_outputs_q, [(tap_index, off), ...]).
    """
    out_size = (in_size - 1) * s + d * (k - 1) + 1
    pad_before = ((k - 1) * d) // s
    padded = pad_before + in_size
    phases = []
    for p in range(s):
        q_p = (out_size - p + s - 1) // s if out_size > p else 0
        taps = []
        for kk in range(k):
            if (kk * d) % s == p:
                off = pad_before + (p - kk * d) // s          # >= 0
                taps.append((kk, off))
                padded = max(padded, q_p + off)
        phases.append((q_p, taps))
    return out_size, pad_before, padded, phases


def _conv_transpose_kernel(x_ref, w_ref, b_ref, out_ref, *, phase_taps, L_pad):
    # x_ref  : (1, C_in_p, X_len)       bf16  zero-padded input, row-flattened (row pitch Wp)
    # w_ref  : (kH*kW, C_out, C_in_p)   bf16  per-tap weight matrices (un-flipped: scatter form)
    # b_ref  : (C_out, 1)               f32
    # out_ref: (1, n_phases, C_out, L_pad)    per-phase flattened outputs (row pitch Wp)
    xf = x_ref[0]                                             # (C_in_p, X_len)
    bias = b_ref[...]                                         # (C_out, 1) f32
    C_out = bias.shape[0]
    for p_idx, taps in enumerate(phase_taps):                 # static Python loop
        if taps:
            t0, off0 = taps[0]
            acc = jnp.dot(w_ref[t0], xf[:, off0:off0 + L_pad],
                          preferred_element_type=jnp.float32)
            for t, off in taps[1:]:
                acc = acc + jnp.dot(w_ref[t], xf[:, off:off + L_pad],
                                    preferred_element_type=jnp.float32)
            out_ref[0, p_idx] = (acc + bias).astype(out_ref.dtype)
        else:
            # Phase receives no taps (e.g. dilation % stride == 0): output is pure bias.
            out_ref[0, p_idx] = jnp.broadcast_to(bias, (C_out, L_pad)).astype(out_ref.dtype)


def conv_transpose2d(x_nchw, weight, bias, *, stride, dilation):
    """ConvTranspose2d matching torch semantics. weight: (C_in, C_out, kH, kW)."""
    N, C_in, H, W = x_nchw.shape
    C_in_w, C_out, kH, kW = weight.shape
    assert C_in == C_in_w
    s, d = stride, dilation

    H_out, pad_h, Hp, phases_h = _phase_plan(H, kH, s, d)
    W_out, pad_w, Wp, phases_w = _phase_plan(W, kW, s, d)
    C_in_p = _round_up(C_in, 8)                               # sublane-align channel dim

    # ---- static plan: per output phase (p_h, p_w), the flat tap offsets ----
    # Per-phase output flat index (row pitch Wp): l = q_h*Wp + q_w; tap (kh, kw) reads
    # x_flat[:, l + off_h*Wp + off_w]  (seam-junk columns are discarded in the wrapper).
    phase_taps, phase_dims = [], []
    L_need = 1
    for p_h in range(s):
        Hq, taps_h = phases_h[p_h]
        for p_w in range(s):
            Wq, taps_w = phases_w[p_w]
            taps = []
            if Hq > 0 and Wq > 0:
                L_need = max(L_need, Hq * Wp)
                for kh, oh in taps_h:
                    for kw, ow in taps_w:
                        taps.append((kh * kW + kw, oh * Wp + ow))
            phase_taps.append(tuple(taps))
            phase_dims.append((Hq, Wq))
    n_ph = s * s
    L_pad = _round_up(L_need, 128)                            # lane-dense, unmasked stores
    max_off = max([off for taps in phase_taps for _, off in taps], default=0)
    X_len = _round_up(max(Hp * Wp, max_off + L_pad), 128)     # all static slices in-bounds

    # ---- glue (plain JAX): pad + channel-pad + flatten; bf16 operands for the MXU ----
    x_pad = jnp.zeros((N, C_in_p, Hp, Wp), jnp.bfloat16)
    x_pad = x_pad.at[:, :C_in, pad_h:pad_h + H, pad_w:pad_w + W].set(
        x_nchw.astype(jnp.bfloat16))
    x_flat = jnp.zeros((N, C_in_p, X_len), jnp.bfloat16)
    x_flat = x_flat.at[:, :, :Hp * Wp].set(x_pad.reshape(N, C_in_p, Hp * Wp))

    # Per-tap (C_out, C_in_p) weight matrices (scatter formulation -> no spatial flip).
    w_all = jnp.zeros((kH * kW, C_out, C_in_p), jnp.bfloat16)
    w_all = w_all.at[:, :, :C_in].set(
        jnp.transpose(weight, (2, 3, 1, 0)).reshape(kH * kW, C_out, C_in).astype(jnp.bfloat16))
    b2 = bias.reshape(C_out, 1).astype(jnp.float32)

    kernel = functools.partial(_conv_transpose_kernel,
                               phase_taps=tuple(phase_taps), L_pad=L_pad)

    out_ph = pl.pallas_call(
        kernel,
        out_shape=jax.ShapeDtypeStruct((N, n_ph, C_out, L_pad), x_nchw.dtype),
        grid_spec=pltpu.PrefetchScalarGridSpec(
            num_scalar_prefetch=0,
            grid=(N,),
            in_specs=[
                pl.BlockSpec((1, C_in_p, X_len), lambda n: (n, 0, 0)),
                pl.BlockSpec((kH * kW, C_out, C_in_p), lambda n: (0, 0, 0)),
                pl.BlockSpec((C_out, 1), lambda n: (0, 0)),
            ],
            out_specs=pl.BlockSpec((1, n_ph, C_out, L_pad), lambda n: (n, 0, 0, 0)),
        ),
        compiler_params=pltpu.CompilerParams(
            dimension_semantics=("parallel",),                # v7x: 2 TCs over the batch
            vmem_limit_bytes=32 * 1024 * 1024,
        ),
    )(x_flat, w_all, b2)

    # ---- de-interleave phases back to NCHW (plain JAX glue) ----
    out = jnp.zeros((N, C_out, H_out, W_out), x_nchw.dtype)
    for p_h in range(s):
        for p_w in range(s):
            p_idx = p_h * s + p_w
            Hq, Wq = phase_dims[p_idx]
            if Hq == 0 or Wq == 0:
                continue
            blk = out_ph[:, p_idx, :, :Hq * Wp].reshape(N, C_out, Hq, Wp)[:, :, :, :Wq]
            out = out.at[:, :, p_h::s, p_w::s].set(blk)
    return out


def _reference_conv_transpose(x, w, b, stride, dilation):
    """Direct scatter-style reference (pure jnp) matching torch.nn.ConvTranspose2d."""
    N, C_in, H, W = x.shape
    _, C_out, kH, kW = w.shape
    H_out = (H - 1) * stride + dilation * (kH - 1) + 1
    W_out = (W - 1) * stride + dilation * (kW - 1) + 1
    out = jnp.zeros((N, C_out, H_out, W_out), jnp.float32)
    for kh in range(kH):
        for kw in range(kW):
            contrib = jnp.einsum('nchw,cd->ndhw', x, w[:, :, kh, kw],
                                 precision=jax.lax.Precision.HIGHEST)
            out = out.at[:, :,
                         kh * dilation: kh * dilation + (H - 1) * stride + 1: stride,
                         kw * dilation: kw * dilation + (W - 1) * stride + 1: stride
                         ].add(contrib)
    return out + b[None, :, None, None]


def _run_case(key, N, C_in, C_out, kH, kW, H, W, stride, dilation):
    kx, kw_, kb = jax.random.split(key, 3)
    x = jax.random.normal(kx, (N, C_in, H, W), dtype=jnp.float32)
    weight = jax.random.normal(kw_, (C_in, C_out, kH, kW), dtype=jnp.float32) * 0.1
    bias = jax.random.normal(kb, (C_out,), dtype=jnp.float32) * 0.1

    out = conv_transpose2d(x, weight, bias, stride=stride, dilation=dilation)
    out = jax.block_until_ready(out)

    # Tight check: reference on bf16-quantized operands (isolates kernel correctness from
    # the intentional bf16 operand cast; both sides accumulate in f32).
    x_q = x.astype(jnp.bfloat16).astype(jnp.float32)
    w_q = weight.astype(jnp.bfloat16).astype(jnp.float32)
    ref_q = _reference_conv_transpose(x_q, w_q, bias, stride, dilation)
    assert out.shape == ref_q.shape, (out.shape, ref_q.shape)
    assert jnp.allclose(out, ref_q, rtol=1e-3, atol=1e-3), \
        float(jnp.max(jnp.abs(out - ref_q)))

    # Loose check vs. full-f32 reference: bounds the bf16 operand quantization drift.
    ref = _reference_conv_transpose(x, weight, bias, stride, dilation)
    assert jnp.allclose(out, ref, rtol=3e-2, atol=3e-2), \
        float(jnp.max(jnp.abs(out - ref)))


if __name__ == "__main__":
    key = jax.random.PRNGKey(0)
    k1, k2, k3 = jax.random.split(key, 3)

    # Primary config (matches the module example): in=4, out=8, k=3, stride=2, dilation=2.
    _run_case(k1, N=2, C_in=4, C_out=8, kH=3, kW=3, H=16, W=16, stride=2, dilation=2)
    # Extra configs exercising the general phase decomposition (multi-phase taps, C_in pad,
    # non-square spatial, even kernel, stride=3).
    _run_case(k2, N=2, C_in=3, C_out=8, kH=3, kW=3, H=9, W=7, stride=2, dilation=1)
    _run_case(k3, N=1, C_in=4, C_out=8, kH=4, kW=4, H=6, W=6, stride=3, dilation=2)

    print("KERNEL_OK")
</pallas_src>

<mosaic_0001>
module attributes {stable_mosaic.version = 11 : i64} {
  func.func @_conv_transpose_kernel(%arg0: i32, %arg1: memref<1x8x512xbf16, #tpu.memory_space<vmem>>, %arg2: memref<9x8x8xbf16, #tpu.memory_space<vmem>>, %arg3: memref<8x1xf32, #tpu.memory_space<vmem>>, %arg4: memref<1x4x8x384xf32, #tpu.memory_space<vmem>>) attributes {dimension_semantics = [#tpu.dimension_semantics<parallel>], iteration_bounds = array<i64: 2>, scalar_prefetch = 0 : i64, scratch_operands = 0 : i64, tpu.core_type = #tpu.core_type<tc>, window_params = [{transform_indices = @transform_0, window_bounds = array<i64: 1, 8, 512>}, {pipeline_mode = #tpu.pipeline_mode<synchronous>, transform_indices = @transform_1, window_bounds = array<i64: 9, 8, 8>}, {pipeline_mode = #tpu.pipeline_mode<synchronous>, transform_indices = @transform_2, window_bounds = array<i64: 8, 1>}, {transform_indices = @transform_3, window_bounds = array<i64: 1, 4, 8, 384>}]} {
    %c0 = arith.constant 0 : index
    %c0_0 = arith.constant 0 : index
    %c0_1 = arith.constant 0 : index
    %0 = vector.load %arg1[%c0, %c0_0, %c0_1] : memref<1x8x512xbf16, #tpu.memory_space<vmem>>, vector<1x8x512xbf16>
    %1 = vector.shape_cast %0 : vector<1x8x512xbf16> to vector<8x512xbf16>
    %c0_2 = arith.constant 0 : index
    %c0_3 = arith.constant 0 : index
    %2 = vector.load %arg3[%c0_2, %c0_3] : memref<8x1xf32, #tpu.memory_space<vmem>>, vector<8x1xf32>
    %c0_4 = arith.constant 0 : index
    %c0_5 = arith.constant 0 : index
    %c0_6 = arith.constant 0 : index
    %3 = vector.load %arg2[%c0_4, %c0_5, %c0_6] : memref<9x8x8xbf16, #tpu.memory_space<vmem>>, vector<1x8x8xbf16>
    %4 = vector.shape_cast %3 : vector<1x8x8xbf16> to vector<8x8xbf16>
    %5 = vector.extract_strided_slice %1 {offsets = [0, 42], sizes = [8, 384], strides = [1, 1]} : vector<8x512xbf16> to vector<8x384xbf16>
    %cst = arith.constant dense<0.000000e+00> : vector<8x384xf32>
    %6 = tpu.matmul %4, %5, %cst {dimension_numbers = #tpu.dot_dimension_numbers<[1], [0], [0], [1], [0, 0, 1, 1], [], []>} : vector<8x8xbf16>, vector<8x384xbf16>, vector<8x384xf32> -> vector<8x384xf32>
    %c1 = arith.constant 1 : index
    %c0_7 = arith.constant 0 : index
    %c0_8 = arith.constant 0 : index
    %7 = vector.load %arg2[%c1, %c0_7, %c0_8] : memref<9x8x8xbf16, #tpu.memory_space<vmem>>, vector<1x8x8xbf16>
    %8 = vector.shape_cast %7 : vector<1x8x8xbf16> to vector<8x8xbf16>
    %9 = vector.extract_strided_slice %1 {offsets = [0, 41], sizes = [8, 384], strides = [1, 1]} : vector<8x512xbf16> to vector<8x384xbf16>
    %cst_9 = arith.constant dense<0.000000e+00> : vector<8x384xf32>
    %10 = tpu.matmul %8, %9, %cst_9 {dimension_numbers = #tpu.dot_dimension_numbers<[1], [0], [0], [1], [0, 0, 1, 1], [], []>} : vector<8x8xbf16>, vector<8x384xbf16>, vector<8x384xf32> -> vector<8x384xf32>
    %11 = arith.addf %6, %10 : vector<8x384xf32>
    %c2 = arith.constant 2 : index
    %c0_10 = arith.constant 0 : index
    %c0_11 = arith.constant 0 : index
    %12 = vector.load %arg2[%c2, %c0_10, %c0_11] : memref<9x8x8xbf16, #tpu.memory_space<vmem>>, vector<1x8x8xbf16>
    %13 = vector.shape_cast %12 : vector<1x8x8xbf16> to vector<8x8xbf16>
    %14 = vector.extract_strided_slice %1 {offsets = [0, 40], sizes = [8, 384], strides = [1, 1]} : vector<8x512xbf16> to vector<8x384xbf16>
    %cst_12 = arith.constant dense<0.000000e+00> : vector<8x384xf32>
    %15 = tpu.matmul %13, %14, %cst_12 {dimension_numbers = #tpu.dot_dimension_numbers<[1], [0], [0], [1], [0, 0, 1, 1], [], []>} : vector<8x8xbf16>, vector<8x384xbf16>, vector<8x384xf32> -> vector<8x384xf32>
    %16 = arith.addf %11, %15 : vector<8x384xf32>
    %c3 = arith.constant 3 : index
    %c0_13 = arith.constant 0 : index
    %c0_14 = arith.constant 0 : index
    %17 = vector.load %arg2[%c3, %c0_13, %c0_14] : memref<9x8x8xbf16, #tpu.memory_space<vmem>>, vector<1x8x8xbf16>
    %18 = vector.shape_cast %17 : vector<1x8x8xbf16> to vector<8x8xbf16>
    %19 = vector.extract_strided_slice %1 {offsets = [0, 22], sizes = [8, 384], strides = [1, 1]} : vector<8x512xbf16> to vector<8x384xbf16>
    %cst_15 = arith.constant dense<0.000000e+00> : vector<8x384xf32>
    %20 = tpu.matmul %18, %19, %cst_15 {dimension_numbers = #tpu.dot_dimension_numbers<[1], [0], [0], [1], [0, 0, 1, 1], [], []>} : vector<8x8xbf16>, vector<8x384xbf16>, vector<8x384xf32> -> vector<8x384xf32>
    %21 = arith.addf %16, %20 : vector<8x384xf32>
    %c4 = arith.constant 4 : index
    %c0_16 = arith.constant 0 : index
    %c0_17 = arith.constant 0 : index
    %22 = vector.load %arg2[%c4, %c0_16, %c0_17] : memref<9x8x8xbf16, #tpu.memory_space<vmem>>, vector<1x8x8xbf16>
    %23 = vector.shape_cast %22 : vector<1x8x8xbf16> to vector<8x8xbf16>
    %24 = vector.extract_strided_slice %1 {offsets = [0, 21], sizes = [8, 384], strides = [1, 1]} : vector<8x512xbf16> to vector<8x384xbf16>
    %cst_18 = arith.constant dense<0.000000e+00> : vector<8x384xf32>
    %25 = tpu.matmul %23, %24, %cst_18 {dimension_numbers = #tpu.dot_dimension_numbers<[1], [0], [0], [1], [0, 0, 1, 1], [], []>} : vector<8x8xbf16>, vector<8x384xbf16>, vector<8x384xf32> -> vector<8x384xf32>
    %26 = arith.addf %21, %25 : vector<8x384xf32>
    %c5 = arith.constant 5 : index
    %c0_19 = arith.constant 0 : index
    %c0_20 = arith.constant 0 : index
    %27 = vector.load %arg2[%c5, %c0_19, %c0_20] : memref<9x8x8xbf16, #tpu.memory_space<vmem>>, vector<1x8x8xbf16>
    %28 = vector.shape_cast %27 : vector<1x8x8xbf16> to vector<8x8xbf16>
    %29 = vector.extract_strided_slice %1 {offsets = [0, 20], sizes = [8, 384], strides = [1, 1]} : vector<8x512xbf16> to vector<8x384xbf16>
    %cst_21 = arith.constant dense<0.000000e+00> : vector<8x384xf32>
    %30 = tpu.matmul %28, %29, %cst_21 {dimension_numbers = #tpu.dot_dimension_numbers<[1], [0], [0], [1], [0, 0, 1, 1], [], []>} : vector<8x8xbf16>, vector<8x384xbf16>, vector<8x384xf32> -> vector<8x384xf32>
    %31 = arith.addf %26, %30 : vector<8x384xf32>
    %c6 = arith.constant 6 : index
    %c0_22 = arith.constant 0 : index
    %c0_23 = arith.constant 0 : index
    %32 = vector.load %arg2[%c6, %c0_22, %c0_23] : memref<9x8x8xbf16, #tpu.memory_space<vmem>>, vector<1x8x8xbf16>
    %33 = vector.shape_cast %32 : vector<1x8x8xbf16> to vector<8x8xbf16>
    %34 = vector.extract_strided_slice %1 {offsets = [0, 2], sizes = [8, 384], strides = [1, 1]} : vector<8x512xbf16> to vector<8x384xbf16>
    %cst_24 = arith.constant dense<0.000000e+00> : vector<8x384xf32>
    %35 = tpu.matmul %33, %34, %cst_24 {dimension_numbers = #tpu.dot_dimension_numbers<[1], [0], [0], [1], [0, 0, 1, 1], [], []>} : vector<8x8xbf16>, vector<8x384xbf16>, vector<8x384xf32> -> vector<8x384xf32>
    %36 = arith.addf %31, %35 : vector<8x384xf32>
    %c7 = arith.constant 7 : index
    %c0_25 = arith.constant 0 : index
    %c0_26 = arith.constant 0 : index
    %37 = vector.load %arg2[%c7, %c0_25, %c0_26] : memref<9x8x8xbf16, #tpu.memory_space<vmem>>, vector<1x8x8xbf16>
    %38 = vector.shape_cast %37 : vector<1x8x8xbf16> to vector<8x8xbf16>
    %39 = vector.extract_strided_slice %1 {offsets = [0, 1], sizes = [8, 384], strides = [1, 1]} : vector<8x512xbf16> to vector<8x384xbf16>
    %cst_27 = arith.constant dense<0.000000e+00> : vector<8x384xf32>
    %40 = tpu.matmul %38, %39, %cst_27 {dimension_numbers = #tpu.dot_dimension_numbers<[1], [0], [0], [1], [0, 0, 1, 1], [], []>} : vector<8x8xbf16>, vector<8x384xbf16>, vector<8x384xf32> -> vector<8x384xf32>
    %41 = arith.addf %36, %40 : vector<8x384xf32>
    %c8 = arith.constant 8 : index
    %c0_28 = arith.constant 0 : index
    %c0_29 = arith.constant 0 : index
    %42 = vector.load %arg2[%c8, %c0_28, %c0_29] : memref<9x8x8xbf16, #tpu.memory_space<vmem>>, vector<1x8x8xbf16>
    %43 = vector.shape_cast %42 : vector<1x8x8xbf16> to vector<8x8xbf16>
    %44 = vector.extract_strided_slice %1 {offsets = [0, 0], sizes = [8, 384], strides = [1, 1]} : vector<8x512xbf16> to vector<8x384xbf16>
    %cst_30 = arith.constant dense<0.000000e+00> : vector<8x384xf32>
    %45 = tpu.matmul %43, %44, %cst_30 {dimension_numbers = #tpu.dot_dimension_numbers<[1], [0], [0], [1], [0, 0, 1, 1], [], []>} : vector<8x8xbf16>, vector<8x384xbf16>, vector<8x384xf32> -> vector<8x384xf32>
    %46 = arith.addf %41, %45 : vector<8x384xf32>
    %47 = vector.broadcast %2 : vector<8x1xf32> to vector<8x384xf32>
    %48 = arith.addf %46, %47 : vector<8x384xf32>
    %c0_31 = arith.constant 0 : index
    %c0_32 = arith.constant 0 : index
    %c0_33 = arith.constant 0 : index
    %c0_34 = arith.constant 0 : index
    %49 = vector.load %arg4[%c0_31, %c0_32, %c0_33, %c0_34] : memref<1x4x8x384xf32, #tpu.memory_space<vmem>>, vector<1x1x8x384xf32>
    %50 = vector.shape_cast %49 : vector<1x1x8x384xf32> to vector<8x384xf32>
    %51 = vector.shape_cast %48 : vector<8x384xf32> to vector<1x1x8x384xf32>
    tpu.vector_store %arg4[%c0_31, %c0_32, %c0_33, %c0_34], %51 {strides = array<i32>} : memref<1x4x8x384xf32, #tpu.memory_space<vmem>>, vector<1x1x8x384xf32>,
    %52 = vector.shape_cast %2 : vector<8x1xf32> to vector<8x1xf32>
    %53 = vector.broadcast %52 : vector<8x1xf32> to vector<8x384xf32>
    %c0_35 = arith.constant 0 : index
    %c1_36 = arith.constant 1 : index
    %c0_37 = arith.constant 0 : index
    %c0_38 = arith.constant 0 : index
    %54 = vector.load %arg4[%c0_35, %c1_36, %c0_37, %c0_38] : memref<1x4x8x384xf32, #tpu.memory_space<vmem>>, vector<1x1x8x384xf32>
    %55 = vector.shape_cast %54 : vector<1x1x8x384xf32> to vector<8x384xf32>
    %56 = vector.shape_cast %53 : vector<8x384xf32> to vector<1x1x8x384xf32>
    tpu.vector_store %arg4[%c0_35, %c1_36, %c0_37, %c0_38], %56 {strides = array<i32>} : memref<1x4x8x384xf32, #tpu.memory_space<vmem>>, vector<1x1x8x384xf32>,
    %57 = vector.shape_cast %2 : vector<8x1xf32> to vector<8x1xf32>
    %58 = vector.broadcast %57 : vector<8x1xf32> to vector<8x384xf32>
    %c0_39 = arith.constant 0 : index
    %c2_40 = arith.constant 2 : index
    %c0_41 = arith.constant 0 : index
    %c0_42 = arith.constant 0 : index
    %59 = vector.load %arg4[%c0_39, %c2_40, %c0_41, %c0_42] : memref<1x4x8x384xf32, #tpu.memory_space<vmem>>, vector<1x1x8x384xf32>
    %60 = vector.shape_cast %59 : vector<1x1x8x384xf32> to vector<8x384xf32>
    %61 = vector.shape_cast %58 : vector<8x384xf32> to vector<1x1x8x384xf32>
    tpu.vector_store %arg4[%c0_39, %c2_40, %c0_41, %c0_42], %61 {strides = array<i32>} : memref<1x4x8x384xf32, #tpu.memory_space<vmem>>, vector<1x1x8x384xf32>,
    %62 = vector.shape_cast %2 : vector<8x1xf32> to vector<8x1xf32>
    %63 = vector.broadcast %62 : vector<8x1xf32> to vector<8x384xf32>
    %c0_43 = arith.constant 0 : index
    %c3_44 = arith.constant 3 : index
    %c0_45 = arith.constant 0 : index
    %c0_46 = arith.constant 0 : index
    %64 = vector.load %arg4[%c0_43, %c3_44, %c0_45, %c0_46] : memref<1x4x8x384xf32, #tpu.memory_space<vmem>>, vector<1x1x8x384xf32>
    %65 = vector.shape_cast %64 : vector<1x1x8x384xf32> to vector<8x384xf32>
    %66 = vector.shape_cast %63 : vector<8x384xf32> to vector<1x1x8x384xf32>
    tpu.vector_store %arg4[%c0_43, %c3_44, %c0_45, %c0_46], %66 {strides = array<i32>} : memref<1x4x8x384xf32, #tpu.memory_space<vmem>>, vector<1x1x8x384xf32>,
    return
  }
  func.func @transform_0(%arg0: i32) -> (i32, i32, i32) {
    %c0_i32 = arith.constant 0 : i32
    %c0_i32_0 = arith.constant 0 : i32
    %c0_i32_1 = arith.constant 0 : i32
    return %arg0, %c0_i32, %c0_i32_0 : i32, i32, i32
  }
  func.func @transform_1(%arg0: i32) -> (i32, i32, i32) {
    %c0_i32 = arith.constant 0 : i32
    %c0_i32_0 = arith.constant 0 : i32
    %c0_i32_1 = arith.constant 0 : i32
    %c0_i32_2 = arith.constant 0 : i32
    return %c0_i32, %c0_i32_0, %c0_i32_1 : i32, i32, i32
  }
  func.func @transform_2(%arg0: i32) -> (i32, i32) {
    %c0_i32 = arith.constant 0 : i32
    %c0_i32_0 = arith.constant 0 : i32
    %c0_i32_1 = arith.constant 0 : i32
    return %c0_i32, %c0_i32_0 : i32, i32
  }
  func.func @transform_3(%arg0: i32) -> (i32, i32, i32, i32) {
    %c0_i32 = arith.constant 0 : i32
    %c0_i32_0 = arith.constant 0 : i32
    %c0_i32_1 = arith.constant 0 : i32
    %c0_i32_2 = arith.constant 0 : i32
    return %arg0, %c0_i32, %c0_i32_0, %c0_i32_1 : i32, i32, i32, i32
  }
}

</mosaic_0001>

<llo_original>
// kernel: tpu_custom_call.1
$region0: #{tpu_custom_call.1}
  #allocation0 [shape = 'u32[]', space=smem, size = 0x4, offset = 0x4, fixed_abs, tag = 'smem constant byte address 0x4 - core index']
  #allocation1 [shape = 'u32[72,128]{1,0:T(1,128)}', space=vmem, size = 0x9000, scoped, tag = 'internal scratch']
  %s0 = inlined_call_operand.vmem [shape: bf16[2,8,512], index: 0, kind: input, shape index: {}]
  %s1 = inlined_call_operand.vmem [shape: bf16[9,8,8], index: 1, kind: input, shape index: {}]
  %s2 = inlined_call_operand.vmem [shape: f32[8,1], index: 2, kind: input, shape index: {}]
  %s3 = inlined_call_operand.hbm [shape: f32[2,4,8,384], index: 3, kind: output, shape index: {}]
  %s4 = sld [smem:[#allocation0]]
  $region45: #{tpu_custom_call.1} parent=0
    _
  %s6 = ssub.s32 1, %s4
  %s7 = scalar_select 0, %s6, %s4
  $region1: #{tpu_custom_call.1} parent=0
    #allocation2 [shape = 'u8[98304]{0}', space=vmem, size = 0x18000, scoped, tag = 'output window, operand 0']
    #allocation3 [shape = 's32[2]{0}', space=sflag, size = 0x8, scoped, tag = 'scoped memory for tpu_custom_call.1']
    %8 = vsyncpa [#allocation3], 0
    %s9 = scalar_lea.sflag [#allocation3], 1
    %10 = vsyncpa %s9, 0
    loop: start=0, step=1, limit=4
    $region2: #{tpu_custom_call.1} parent=1 // loop_pre_header
      _
    $region3: #{tpu_custom_call.1} parent=1 // loop_header
      %s12 = sphi 0, %s16
      %p13 = scmp.ge.s32.totalorder %s12, 4
      %s22 = sphi 0, %s24
      %s25 = sphi 0, %s22
      %s26 = sphi 0, %s25
      %s42 = sphi 0, %s26
      %s46 = sphi 0, %s46
      %s48 = sphi 0, %s46
      %s49 = sphi 0, %s48
      %s63 = sphi 0, %s49
      %s67 = sphi 0, %s67
      %s69 = sphi 0, %s67
      %s70 = sphi 0, %s69
      %s84 = sphi 0, %s70
      %s90 = sphi 0, %s92
      %s93 = sphi 0, %s90
      %s94 = sphi 0, %s93
      %s110 = sphi 0, %s94
    $region4: #{tpu_custom_call.1} parent=1 // loop_header_branch
      %15 = sbr.rel (%p13) target = $region8
    $region5: #{tpu_custom_call.1} parent=1 // loop_body
      %s17 = ssub.s32 %s12, 1
      %s18 = ssub.s32 %s12, 2
      %s19 = sadd.s32 %s12, 1
      %s20 = ssub.s32 %s12, %s19
      %p21 = scmp.eq.s32.totalorder %s20, 0
      %s23 = sadd.s32 %s22, 1
      %s24 = scalar_select %p21, %s22, %s23
      %p27 = pneg %p21
      %p28 = scmp.eq.s32.totalorder %s12, 1
      %p29 = por %p27, %p28
      %p30 = scmp.ne.s32.totalorder %s22, %s25
      %p31 = scmp.eq.s32.totalorder %s12, 0
      %p32 = por %p30, %p31
      %p33 = scmp.ne.s32.totalorder %s22, %s25
      %p34 = scmp.eq.s32.totalorder %s17, 1
      %p35 = por %p33, %p34
      %p36 = scmp.ne.s32.totalorder %s25, %s26
      %p37 = scmp.eq.s32.totalorder %s17, 0
      %p38 = por %p36, %p37
      %p39 = scmp.ne.s32.totalorder %s25, %s26
      %p40 = scmp.eq.s32.totalorder %s18, 1
      %p41 = por %p39, %p40
      %p43 = scmp.ne.s32.totalorder %s26, %s42
      %p44 = scmp.eq.s32.totalorder %s18, 0
      %p45 = por %p43, %p44
      %s47 = sadd.s32 %s46, 1
      %p50 = scmp.eq.s32.totalorder %s12, 1
      %p51 = scmp.ne.s32.totalorder %s46, %s48
      %p52 = scmp.eq.s32.totalorder %s12, 0
      %p53 = por %p51, %p52
      %p54 = scmp.ne.s32.totalorder %s46, %s48
      %p55 = scmp.eq.s32.totalorder %s17, 1
      %p56 = por %p54, %p55
      %p57 = scmp.ne.s32.totalorder %s48, %s49
      %p58 = scmp.eq.s32.totalorder %s17, 0
      %p59 = por %p57, %p58
      %p60 = scmp.ne.s32.totalorder %s48, %s49
      %p61 = scmp.eq.s32.totalorder %s18, 1
      %p62 = por %p60, %p61
      %p64 = scmp.ne.s32.totalorder %s49, %s63
      %p65 = scmp.eq.s32.totalorder %s18, 0
      %p66 = por %p64, %p65
      %s68 = sadd.s32 %s67, 1
      %p71 = scmp.eq.s32.totalorder %s12, 1
      %p72 = scmp.ne.s32.totalorder %s67, %s69
      %p73 = scmp.eq.s32.totalorder %s12, 0
      %p74 = por %p72, %p73
      %p75 = scmp.ne.s32.totalorder %s67, %s69
      %p76 = scmp.eq.s32.totalorder %s17, 1
      %p77 = por %p75, %p76
      %p78 = scmp.ne.s32.totalorder %s69, %s70
      %p79 = scmp.eq.s32.totalorder %s17, 0
      %p80 = por %p78, %p79
      %p81 = scmp.ne.s32.totalorder %s69, %s70
      %p82 = scmp.eq.s32.totalorder %s18, 1
      %p83 = por %p81, %p82
      %p85 = scmp.ne.s32.totalorder %s70, %s84
      %p86 = scmp.eq.s32.totalorder %s18, 0
      %p87 = por %p85, %p86
      %s88 = ssub.s32 %s12, %s19
      %p89 = scmp.eq.s32.totalorder %s88, 0
      %s91 = sadd.s32 %s90, 1
      %s92 = scalar_select %p89, %s90, %s91
      %p95 = pneg %p89
      %p96 = scmp.eq.s32.totalorder %s12, 1
      %p97 = por %p95, %p96
      %p98 = scmp.ne.s32.totalorder %s90, %s93
      %p99 = scmp.eq.s32.totalorder %s12, 0
      %p100 = por %p98, %p99
      %p101 = scmp.ne.s32.totalorder %s90, %s93
      %p102 = scmp.eq.s32.totalorder %s17, 1
      %p103 = por %p101, %p102
      %p104 = scmp.ne.s32.totalorder %s93, %s94
      %p105 = scmp.eq.s32.totalorder %s17, 0
      %p106 = por %p104, %p105
      %p107 = scmp.ne.s32.totalorder %s93, %s94
      %p108 = scmp.eq.s32.totalorder %s18, 1
      %p109 = por %p107, %p108
      %p111 = scmp.ne.s32.totalorder %s94, %s110
      %p112 = scmp.eq.s32.totalorder %s18, 0
      %p113 = por %p111, %p112
      %p114 = scmp.le.s32.totalorder 1, %s12
      %p115 = scmp.lt.s32.totalorder %s12, 3
      %p116 = pnand %p114, %p115
      %p117 = pneg %p116
      // Predicated region
      $region9: #{tpu_custom_call.1} parent=5 // pred_check
        _
      $region10: #{tpu_custom_call.1} parent=5 // pred_check_branch
        %119 = sbr.rel (%p116) target = $region12
      $region11: #{tpu_custom_call.1} parent=5 // pred_region
        %s120 = ssub.s32 %s12, 1
        // Predicated region
        $region13: #{tpu_custom_call.1} parent=11 // pred_check
          %p121 = pneg %p59
        $region14: #{tpu_custom_call.1} parent=11 // pred_check_branch
          %123 = sbr.rel (%p121) target = $region16
        $region15: #{tpu_custom_call.1} parent=11 // pred_region
          _
        $region16: #{tpu_custom_call.1} parent=11 // pred_fallthru
          _
        // Predicated region
        $region17: #{tpu_custom_call.1} parent=11 // pred_check
          %p124 = pneg %p80
        $region18: #{tpu_custom_call.1} parent=11 // pred_check_branch
          %126 = sbr.rel (%p124) target = $region20
        $region19: #{tpu_custom_call.1} parent=11 // pred_region
          _
        $region20: #{tpu_custom_call.1} parent=11 // pred_fallthru
          _
      $region12: #{tpu_custom_call.1} parent=5 // pred_fallthru
        _
      %p127 = scmp.lt.s32.totalorder %s12, 2
      // Predicated region
      $region21: #{tpu_custom_call.1} parent=5 // pred_check
        %p128 = pneg %p127
      $region22: #{tpu_custom_call.1} parent=5 // pred_check_branch
        %130 = sbr.rel (%p128) target = $region24
      $region23: #{tpu_custom_call.1} parent=5 // pred_region
        // Predicated region
        $region25: #{tpu_custom_call.1} parent=23 // pred_check
          %p131 = pneg %p32
        $region26: #{tpu_custom_call.1} parent=23 // pred_check_branch
          %133 = sbr.rel (%p131) target = $region28
        $region27: #{tpu_custom_call.1} parent=23 // pred_region
          %p134 = scmp.lt.s32.totalorder %s12, 1
          %s135 = scalar_select %p134, %s12, 1
          %s136 = smul.addr %s135, 4
          %s137 = smul.addr %s136, 4
          %s138 = scalar_lea.vmem %s0, %s137
        $region28: #{tpu_custom_call.1} parent=23 // pred_fallthru
          _
      $region24: #{tpu_custom_call.1} parent=5 // pred_fallthru
        _
      %p139 = scmp.le.s32.totalorder 1, %s12
      %p140 = scmp.lt.s32.totalorder %s12, 3
      %p141 = pnand %p139, %p140
      %p142 = pneg %p141
      // Predicated region
      $region29: #{tpu_custom_call.1} parent=5 // pred_check
        _
      $region30: #{tpu_custom_call.1} parent=5 // pred_check_branch
        %144 = sbr.rel (%p141) target = $region32
      $region31: #{tpu_custom_call.1} parent=5 // pred_region
        %s145 = ssub.s32 %s12, 1
        %p146 = scmp.lt.s32.totalorder %s17, 1
        %s147 = scalar_select %p146, %s17, 1
        %s148 = smul.addr %s147, 4
        %s149 = smul.addr %s148, 4
        %s150 = scalar_lea.vmem %s0, %s149
        %p151 = pneg %p38
        %p152 = pneg %p35
        %p153 = pneg %p59
        %p154 = pneg %p56
        %p155 = pneg %p80
        %p156 = pneg %p77
        %p157 = pneg %p106
        %p158 = pneg %p103
        %s159 = sand.u32 %s93, 1
        %s160 = scalar_lea.sflag [#allocation3], %s159
        %s161 = sand.u32 %s93, 1
        %s162 = smul.addr %s161, 96
        %s163 = scalar_lea.vmem [#allocation2], %s162
        %p164 = scmp.lt.s32.totalorder %s17, 1
        %s165 = scalar_select %p164, %s17, 1
        %s166 = smul.addr %s165, 4
        %s167 = smul.addr %s166, 4
        %s168 = scalar_lea.vmem %s0, %s167
        %v170 = vld [vmem:[%s168] sm:$0xff]
        %v171 = vld [vmem:[%s168 + $0x8] sm:$0xff]
        %v172 = vld [vmem:[%s2] sm:$0xff]
        %v173 = vld [vmem:[%s1] sm:$0xf]
        %s174 = scalar_lea.vmem %s1, 4
        %v175 = vld [vmem:[%s174] sm:$0xf]
        %v178 = vunpack.c.l.b16 %v170
        %v179 = vunpack.c.h.b16 %v170
        %v180 = vunpack.c.l.b16 %v171
        %v181 = vunpack.c.h.b16 %v171
        %v182 = vpack.c.b16 %v178, %v178
        %v183 = vpack.c.b16 %v179, %v179
        %v184 = vpack.c.b16 %v180, %v180
        %v185 = vpack.c.b16 %v181, %v181
        %186 = vrot.lane.b32.xlu0 %v182, 87
        %v187 = vpop.permute.xlu0 %186
        %188 = vrot.lane.b32.xlu0 %v183, 87
        %v189 = vpop.permute.xlu0 %188
        %190 = vrot.lane.b32.xlu0 %v184, 87
        %v191 = vpop.permute.xlu0 %190
        %192 = vrot.lane.b32.xlu0 %v185, 87
        %v193 = vpop.permute.xlu0 %192
        %vm194 = vcmask 711680
        %v195 = vsel %vm194, %v187, %v189
        %v196 = vsel %vm194, %v189, %v191
        %v197 = vsel %vm194, %v191, %v193
        %vm198 = vcmask 64512
        %v200 = vsel %vm198, %v175, 0
        %vm202 = vcmask 1043456
        %v204 = vsel %vm202, %v195, 0
        %v207 = vsel %vm202, %v196, 0
        %v210 = vsel %vm202, %v197, 0
        %212 = vmatpush.bf16.msra.mxu0 0
        %213 = vmatpush.bf16.msra.mxu0 0
        %214 = vmatpush.bf16.msra.mxu0 0
        %215 = vmatpush.bf16.msra.mxu0 0
        %216 = vmatpush.bf16.msra.mxu0 0
        %217 = vmatpush.bf16.msra.mxu0 0
        %218 = vmatpush.bf16.msra.mxu0 0
        %219 = vmatpush.bf16.msra.mxu0 %v204
        %220 = vmatmul.bf16.gmra.mxu0 %v200
        %v221 = vpop.f32.mrf.mxu0
        %v222 = vadd.f32 0.0, %v221
        %v223 = vpop.f32.mrf.mxu0
        %224 = vdwg.mxu0
        %225 = vmatpush.bf16.msra.mxu0 0
        %226 = vmatpush.bf16.msra.mxu0 0
        %227 = vmatpush.bf16.msra.mxu0 0
        %228 = vmatpush.bf16.msra.mxu0 0
        %229 = vmatpush.bf16.msra.mxu0 0
        %230 = vmatpush.bf16.msra.mxu0 0
        %231 = vmatpush.bf16.msra.mxu0 0
        %232 = vmatpush.bf16.msra.mxu0 %v207
        %233 = vmatmul.bf16.gmra.mxu0 %v200
        %v234 = vpop.f32.mrf.mxu0
        %v235 = vadd.f32 0.0, %v234
        %v236 = vpop.f32.mrf.mxu0
        %237 = vdwg.mxu0
        %238 = vmatpush.bf16.msra.mxu0 0
        %239 = vmatpush.bf16.msra.mxu0 0
        %240 = vmatpush.bf16.msra.mxu0 0
        %241 = vmatpush.bf16.msra.mxu0 0
        %242 = vmatpush.bf16.msra.mxu0 0
        %243 = vmatpush.bf16.msra.mxu0 0
        %244 = vmatpush.bf16.msra.mxu0 0
        %245 = vmatpush.bf16.msra.mxu0 %v210
        %246 = vmatmul.bf16.gmra.mxu0 %v200
        %v247 = vpop.f32.mrf.mxu0
        %v248 = vadd.f32 0.0, %v247
        %v249 = vpop.f32.mrf.mxu0
        %250 = vdwg.mxu0
        %251 = vrot.lane.b32.xlu0 %v182, 86
        %v252 = vpop.permute.xlu0 %251
        %253 = vrot.lane.b32.xlu0 %v183, 86
        %v254 = vpop.permute.xlu0 %253
        %255 = vrot.lane.b32.xlu0 %v184, 86
        %v256 = vpop.permute.xlu0 %255
        %257 = vrot.lane.b32.xlu0 %v185, 86
        %v258 = vpop.permute.xlu0 %257
        %vm259 = vcmask 703488
        %v260 = vsel %vm259, %v252, %v254
        %v261 = vsel %vm259, %v254, %v256
        %v262 = vsel %vm259, %v256, %v258
        %v264 = vsel %vm198, %v173, 0
        %v267 = vsel %vm202, %v260, 0
        %v270 = vsel %vm202, %v261, 0
        %v273 = vsel %vm202, %v262, 0
        %275 = vmatpush.bf16.msra.mxu0 0
        %276 = vmatpush.bf16.msra.mxu0 0
        %277 = vmatpush.bf16.msra.mxu0 0
        %278 = vmatpush.bf16.msra.mxu0 0
        %279 = vmatpush.bf16.msra.mxu0 0
        %280 = vmatpush.bf16.msra.mxu0 0
        %281 = vmatpush.bf16.msra.mxu0 0
        %282 = vmatpush.bf16.msra.mxu0 %v267
        %283 = vmatmul.bf16.gmra.mxu0 %v264
        %v284 = vpop.f32.mrf.mxu0
        %v285 = vadd.f32 %v222, %v284
        %v286 = vpop.f32.mrf.mxu0
        %287 = vdwg.mxu0
        %288 = vmatpush.bf16.msra.mxu0 0
        %289 = vmatpush.bf16.msra.mxu0 0
        %290 = vmatpush.bf16.msra.mxu0 0
        %291 = vmatpush.bf16.msra.mxu0 0
        %292 = vmatpush.bf16.msra.mxu0 0
        %293 = vmatpush.bf16.msra.mxu0 0
        %294 = vmatpush.bf16.msra.mxu0 0
        %295 = vmatpush.bf16.msra.mxu0 %v270
        %296 = vmatmul.bf16.gmra.mxu0 %v264
        %v297 = vpop.f32.mrf.mxu0
        %v298 = vadd.f32 %v235, %v297
        %v299 = vpop.f32.mrf.mxu0
        %300 = vdwg.mxu0
        %301 = vmatpush.bf16.msra.mxu0 0
        %302 = vmatpush.bf16.msra.mxu0 0
        %303 = vmatpush.bf16.msra.mxu0 0
        %304 = vmatpush.bf16.msra.mxu0 0
        %305 = vmatpush.bf16.msra.mxu0 0
        %306 = vmatpush.bf16.msra.mxu0 0
        %307 = vmatpush.bf16.msra.mxu0 0
        %308 = vmatpush.bf16.msra.mxu0 %v273
        %309 = vmatmul.bf16.gmra.mxu0 %v264
        %v310 = vpop.f32.mrf.mxu0
        %v311 = vadd.f32 %v248, %v310
        %v312 = vpop.f32.mrf.mxu0
        %313 = vdwg.mxu0
        %s314 = scalar_lea.vmem %s1, 8
        %v315 = vld [vmem:[%s314] sm:$0xf]
        %316 = vrot.lane.b32.xlu0 %v182, 88
        %v317 = vpop.permute.xlu0 %316
        %318 = vrot.lane.b32.xlu0 %v183, 88
        %v319 = vpop.permute.xlu0 %318
        %320 = vrot.lane.b32.xlu0 %v184, 88
        %v321 = vpop.permute.xlu0 %320
        %322 = vrot.lane.b32.xlu0 %v185, 88
        %v323 = vpop.permute.xlu0 %322
        %vm324 = vcmask 719872
        %v325 = vsel %vm324, %v317, %v319
        %v326 = vsel %vm324, %v319, %v321
        %v327 = vsel %vm324, %v321, %v323
        %v329 = vsel %vm198, %v315, 0
        %v332 = vsel %vm202, %v325, 0
        %v335 = vsel %vm202, %v326, 0
        %v338 = vsel %vm202, %v327, 0
        %340 = vmatpush.bf16.msra.mxu0 0
        %341 = vmatpush.bf16.msra.mxu0 0
        %342 = vmatpush.bf16.msra.mxu0 0
        %343 = vmatpush.bf16.msra.mxu0 0
        %344 = vmatpush.bf16.msra.mxu0 0
        %345 = vmatpush.bf16.msra.mxu0 0
        %346 = vmatpush.bf16.msra.mxu0 0
        %347 = vmatpush.bf16.msra.mxu0 %v332
        %348 = vmatmul.bf16.gmra.mxu0 %v329
        %v349 = vpop.f32.mrf.mxu0
        %v350 = vadd.f32 0.0, %v349
        %v351 = vpop.f32.mrf.mxu0
        %352 = vdwg.mxu0
        %353 = vmatpush.bf16.msra.mxu0 0
        %354 = vmatpush.bf16.msra.mxu0 0
        %355 = vmatpush.bf16.msra.mxu0 0
        %356 = vmatpush.bf16.msra.mxu0 0
        %357 = vmatpush.bf16.msra.mxu0 0
        %358 = vmatpush.bf16.msra.mxu0 0
        %359 = vmatpush.bf16.msra.mxu0 0
        %360 = vmatpush.bf16.msra.mxu0 %v335
        %361 = vmatmul.bf16.gmra.mxu0 %v329
        %v362 = vpop.f32.mrf.mxu0
        %v363 = vadd.f32 0.0, %v362
        %v364 = vpop.f32.mrf.mxu0
        %365 = vdwg.mxu0
        %366 = vmatpush.bf16.msra.mxu0 0
        %367 = vmatpush.bf16.msra.mxu0 0
        %368 = vmatpush.bf16.msra.mxu0 0
        %369 = vmatpush.bf16.msra.mxu0 0
        %370 = vmatpush.bf16.msra.mxu0 0
        %371 = vmatpush.bf16.msra.mxu0 0
        %372 = vmatpush.bf16.msra.mxu0 0
        %373 = vmatpush.bf16.msra.mxu0 %v338
        %374 = vmatmul.bf16.gmra.mxu0 %v329
        %v375 = vpop.f32.mrf.mxu0
        %v376 = vadd.f32 0.0, %v375
        %v377 = vpop.f32.mrf.mxu0
        %378 = vdwg.mxu0
        %v379 = vadd.f32 %v285, %v350
        %v380 = vadd.f32 %v298, %v363
        %v381 = vadd.f32 %v311, %v376
        %s382 = scalar_lea.vmem %s1, 12
        %v383 = vld [vmem:[%s382] sm:$0xf]
        %384 = vrot.lane.b32.xlu0 %v182, 106
        %v385 = vpop.permute.xlu0 %384
        %386 = vrot.lane.b32.xlu0 %v183, 106
        %v387 = vpop.permute.xlu0 %386
        %388 = vrot.lane.b32.xlu0 %v184, 106
        %v389 = vpop.permute.xlu0 %388
        %390 = vrot.lane.b32.xlu0 %v185, 106
        %v391 = vpop.permute.xlu0 %390
        %vm392 = vcmask 867328
        %v393 = vsel %vm392, %v385, %v387
        %v394 = vsel %vm392, %v387, %v389
        %v395 = vsel %vm392, %v389, %v391
        %v397 = vsel %vm198, %v383, 0
        %v400 = vsel %vm202, %v393, 0
        %v403 = vsel %vm202, %v394, 0
        %v406 = vsel %vm202, %v395, 0
        %408 = vmatpush.bf16.msra.mxu0 0
        %409 = vmatpush.bf16.msra.mxu0 0
        %410 = vmatpush.bf16.msra.mxu0 0
        %411 = vmatpush.bf16.msra.mxu0 0
        %412 = vmatpush.bf16.msra.mxu0 0
        %413 = vmatpush.bf16.msra.mxu0 0
        %414 = vmatpush.bf16.msra.mxu0 0
        %415 = vmatpush.bf16.msra.mxu0 %v400
        %416 = vmatmul.bf16.gmra.mxu0 %v397
        %v417 = vpop.f32.mrf.mxu0
        %v418 = vadd.f32 0.0, %v417
        %v419 = vpop.f32.mrf.mxu0
        %420 = vdwg.mxu0
        %421 = vmatpush.bf16.msra.mxu0 0
        %422 = vmatpush.bf16.msra.mxu0 0
        %423 = vmatpush.bf16.msra.mxu0 0
        %424 = vmatpush.bf16.msra.mxu0 0
        %425 = vmatpush.bf16.msra.mxu0 0
        %426 = vmatpush.bf16.msra.mxu0 0
        %427 = vmatpush.bf16.msra.mxu0 0
        %428 = vmatpush.bf16.msra.mxu0 %v403
        %429 = vmatmul.bf16.gmra.mxu0 %v397
        %v430 = vpop.f32.mrf.mxu0
        %v431 = vadd.f32 0.0, %v430
        %v432 = vpop.f32.mrf.mxu0
        %433 = vdwg.mxu0
        %434 = vmatpush.bf16.msra.mxu0 0
        %435 = vmatpush.bf16.msra.mxu0 0
        %436 = vmatpush.bf16.msra.mxu0 0
        %437 = vmatpush.bf16.msra.mxu0 0
        %438 = vmatpush.bf16.msra.mxu0 0
        %439 = vmatpush.bf16.msra.mxu0 0
        %440 = vmatpush.bf16.msra.mxu0 0
        %441 = vmatpush.bf16.msra.mxu0 %v406
        %442 = vmatmul.bf16.gmra.mxu0 %v397
        %v443 = vpop.f32.mrf.mxu0
        %v444 = vadd.f32 0.0, %v443
        %v445 = vpop.f32.mrf.mxu0
        %446 = vdwg.mxu0
        %v447 = vadd.f32 %v379, %v418
        %v448 = vadd.f32 %v380, %v431
        %v449 = vadd.f32 %v381, %v444
        %s450 = scalar_lea.vmem %s1, 16
        %v451 = vld [vmem:[%s450] sm:$0xf]
        %452 = vrot.lane.b32.xlu0 %v182, 107
        %v453 = vpop.permute.xlu0 %452
        %454 = vrot.lane.b32.xlu0 %v183, 107
        %v455 = vpop.permute.xlu0 %454
        %456 = vrot.lane.b32.xlu0 %v184, 107
        %v457 = vpop.permute.xlu0 %456
        %458 = vrot.lane.b32.xlu0 %v185, 107
        %v459 = vpop.permute.xlu0 %458
        %vm460 = vcmask 875520
        %v461 = vsel %vm460, %v453, %v455
        %v462 = vsel %vm460, %v455, %v457
        %v463 = vsel %vm460, %v457, %v459
        %v465 = vsel %vm198, %v451, 0
        %v468 = vsel %vm202, %v461, 0
        %v471 = vsel %vm202, %v462, 0
        %v474 = vsel %vm202, %v463, 0
        %476 = vmatpush.bf16.msra.mxu0 0
        %477 = vmatpush.bf16.msra.mxu0 0
        %478 = vmatpush.bf16.msra.mxu0 0
        %479 = vmatpush.bf16.msra.mxu0 0
        %480 = vmatpush.bf16.msra.mxu0 0
        %481 = vmatpush.bf16.msra.mxu0 0
        %482 = vmatpush.bf16.msra.mxu0 0
        %483 = vmatpush.bf16.msra.mxu0 %v468
        %484 = vmatmul.bf16.gmra.mxu0 %v465
        %v485 = vpop.f32.mrf.mxu0
        %v486 = vadd.f32 0.0, %v485
        %v487 = vpop.f32.mrf.mxu0
        %488 = vdwg.mxu0
        %489 = vmatpush.bf16.msra.mxu0 0
        %490 = vmatpush.bf16.msra.mxu0 0
        %491 = vmatpush.bf16.msra.mxu0 0
        %492 = vmatpush.bf16.msra.mxu0 0
        %493 = vmatpush.bf16.msra.mxu0 0
        %494 = vmatpush.bf16.msra.mxu0 0
        %495 = vmatpush.bf16.msra.mxu0 0
        %496 = vmatpush.bf16.msra.mxu0 %v471
        %497 = vmatmul.bf16.gmra.mxu0 %v465
        %v498 = vpop.f32.mrf.mxu0
        %v499 = vadd.f32 0.0, %v498
        %v500 = vpop.f32.mrf.mxu0
        %501 = vdwg.mxu0
        %502 = vmatpush.bf16.msra.mxu0 0
        %503 = vmatpush.bf16.msra.mxu0 0
        %504 = vmatpush.bf16.msra.mxu0 0
        %505 = vmatpush.bf16.msra.mxu0 0
        %506 = vmatpush.bf16.msra.mxu0 0
        %507 = vmatpush.bf16.msra.mxu0 0
        %508 = vmatpush.bf16.msra.mxu0 0
        %509 = vmatpush.bf16.msra.mxu0 %v474
        %510 = vmatmul.bf16.gmra.mxu0 %v465
        %v511 = vpop.f32.mrf.mxu0
        %v512 = vadd.f32 0.0, %v511
        %v513 = vpop.f32.mrf.mxu0
        %514 = vdwg.mxu0
        %v515 = vadd.f32 %v447, %v486
        %v516 = vadd.f32 %v448, %v499
        %v517 = vadd.f32 %v449, %v512
        %s518 = scalar_lea.vmem %s1, 20
        %v519 = vld [vmem:[%s518] sm:$0xf]
        %520 = vrot.lane.b32.xlu0 %v182, 108
        %v521 = vpop.permute.xlu0 %520
        %522 = vrot.lane.b32.xlu0 %v183, 108
        %v523 = vpop.permute.xlu0 %522
        %524 = vrot.lane.b32.xlu0 %v184, 108
        %v525 = vpop.permute.xlu0 %524
        %526 = vrot.lane.b32.xlu0 %v185, 108
        %v527 = vpop.permute.xlu0 %526
        %vm528 = vcmask 883712
        %v529 = vsel %vm528, %v521, %v523
        %v530 = vsel %vm528, %v523, %v525
        %v531 = vsel %vm528, %v525, %v527
        %v533 = vsel %vm198, %v519, 0
        %v536 = vsel %vm202, %v529, 0
        %v539 = vsel %vm202, %v530, 0
        %v542 = vsel %vm202, %v531, 0
        %544 = vmatpush.bf16.msra.mxu0 0
        %545 = vmatpush.bf16.msra.mxu0 0
        %546 = vmatpush.bf16.msra.mxu0 0
        %547 = vmatpush.bf16.msra.mxu0 0
        %548 = vmatpush.bf16.msra.mxu0 0
        %549 = vmatpush.bf16.msra.mxu0 0
        %550 = vmatpush.bf16.msra.mxu0 0
        %551 = vmatpush.bf16.msra.mxu0 %v536
        %552 = vmatmul.bf16.gmra.mxu0 %v533
        %v553 = vpop.f32.mrf.mxu0
        %v554 = vadd.f32 0.0, %v553
        %v555 = vpop.f32.mrf.mxu0
        %556 = vdwg.mxu0
        %557 = vmatpush.bf16.msra.mxu0 0
        %558 = vmatpush.bf16.msra.mxu0 0
        %559 = vmatpush.bf16.msra.mxu0 0
        %560 = vmatpush.bf16.msra.mxu0 0
        %561 = vmatpush.bf16.msra.mxu0 0
        %562 = vmatpush.bf16.msra.mxu0 0
        %563 = vmatpush.bf16.msra.mxu0 0
        %564 = vmatpush.bf16.msra.mxu0 %v539
        %565 = vmatmul.bf16.gmra.mxu0 %v533
        %v566 = vpop.f32.mrf.mxu0
        %v567 = vadd.f32 0.0, %v566
        %v568 = vpop.f32.mrf.mxu0
        %569 = vdwg.mxu0
        %570 = vmatpush.bf16.msra.mxu0 0
        %571 = vmatpush.bf16.msra.mxu0 0
        %572 = vmatpush.bf16.msra.mxu0 0
        %573 = vmatpush.bf16.msra.mxu0 0
        %574 = vmatpush.bf16.msra.mxu0 0
        %575 = vmatpush.bf16.msra.mxu0 0
        %576 = vmatpush.bf16.msra.mxu0 0
        %577 = vmatpush.bf16.msra.mxu0 %v542
        %578 = vmatmul.bf16.gmra.mxu0 %v533
        %v579 = vpop.f32.mrf.mxu0
        %v580 = vadd.f32 0.0, %v579
        %v581 = vpop.f32.mrf.mxu0
        %582 = vdwg.mxu0
        %v583 = vadd.f32 %v515, %v554
        %v584 = vadd.f32 %v516, %v567
        %v585 = vadd.f32 %v517, %v580
        %s586 = scalar_lea.vmem %s1, 24
        %v587 = vld [vmem:[%s586] sm:$0xf]
        %588 = vrot.lane.b32.xlu0 %v182, 126
        %v589 = vpop.permute.xlu0 %588
        %590 = vrot.lane.b32.xlu0 %v183, 126
        %v591 = vpop.permute.xlu0 %590
        %592 = vrot.lane.b32.xlu0 %v184, 126
        %v593 = vpop.permute.xlu0 %592
        %594 = vrot.lane.b32.xlu0 %v185, 126
        %v595 = vpop.permute.xlu0 %594
        %vm596 = vcmask 1031168
        %v597 = vsel %vm596, %v589, %v591
        %v598 = vsel %vm596, %v591, %v593
        %v599 = vsel %vm596, %v593, %v595
        %v601 = vsel %vm198, %v587, 0
        %v604 = vsel %vm202, %v597, 0
        %v607 = vsel %vm202, %v598, 0
        %v610 = vsel %vm202, %v599, 0
        %612 = vmatpush.bf16.msra.mxu0 0
        %613 = vmatpush.bf16.msra.mxu0 0
        %614 = vmatpush.bf16.msra.mxu0 0
        %615 = vmatpush.bf16.msra.mxu0 0
        %616 = vmatpush.bf16.msra.mxu0 0
        %617 = vmatpush.bf16.msra.mxu0 0
        %618 = vmatpush.bf16.msra.mxu0 0
        %619 = vmatpush.bf16.msra.mxu0 %v604
        %620 = vmatmul.bf16.gmra.mxu0 %v601
        %v621 = vpop.f32.mrf.mxu0
        %v622 = vadd.f32 0.0, %v621
        %v623 = vpop.f32.mrf.mxu0
        %624 = vdwg.mxu0
        %625 = vmatpush.bf16.msra.mxu0 0
        %626 = vmatpush.bf16.msra.mxu0 0
        %627 = vmatpush.bf16.msra.mxu0 0
        %628 = vmatpush.bf16.msra.mxu0 0
        %629 = vmatpush.bf16.msra.mxu0 0
        %630 = vmatpush.bf16.msra.mxu0 0
        %631 = vmatpush.bf16.msra.mxu0 0
        %632 = vmatpush.bf16.msra.mxu0 %v607
        %633 = vmatmul.bf16.gmra.mxu0 %v601
        %v634 = vpop.f32.mrf.mxu0
        %v635 = vadd.f32 0.0, %v634
        %v636 = vpop.f32.mrf.mxu0
        %637 = vdwg.mxu0
        %638 = vmatpush.bf16.msra.mxu0 0
        %639 = vmatpush.bf16.msra.mxu0 0
        %640 = vmatpush.bf16.msra.mxu0 0
        %641 = vmatpush.bf16.msra.mxu0 0
        %642 = vmatpush.bf16.msra.mxu0 0
        %643 = vmatpush.bf16.msra.mxu0 0
        %644 = vmatpush.bf16.msra.mxu0 0
        %645 = vmatpush.bf16.msra.mxu0 %v610
        %646 = vmatmul.bf16.gmra.mxu0 %v601
        %v647 = vpop.f32.mrf.mxu0
        %v648 = vadd.f32 0.0, %v647
        %v649 = vpop.f32.mrf.mxu0
        %650 = vdwg.mxu0
        %v651 = vadd.f32 %v583, %v622
        %v652 = vadd.f32 %v584, %v635
        %v653 = vadd.f32 %v585, %v648
        %s654 = scalar_lea.vmem %s1, 28
        %v655 = vld [vmem:[%s654] sm:$0xf]
        %656 = vrot.lane.b32.xlu0 %v182, 127
        %v657 = vpop.permute.xlu0 %656
        %658 = vrot.lane.b32.xlu0 %v183, 127
        %v659 = vpop.permute.xlu0 %658
        %660 = vrot.lane.b32.xlu0 %v184, 127
        %v661 = vpop.permute.xlu0 %660
        %662 = vrot.lane.b32.xlu0 %v185, 127
        %v663 = vpop.permute.xlu0 %662
        %vm664 = vcmask 1039360
        %v665 = vsel %vm664, %v657, %v659
        %v666 = vsel %vm664, %v659, %v661
        %v667 = vsel %vm664, %v661, %v663
        %v669 = vsel %vm198, %v655, 0
        %v672 = vsel %vm202, %v665, 0
        %v675 = vsel %vm202, %v666, 0
        %v678 = vsel %vm202, %v667, 0
        %680 = vmatpush.bf16.msra.mxu0 0
        %681 = vmatpush.bf16.msra.mxu0 0
        %682 = vmatpush.bf16.msra.mxu0 0
        %683 = vmatpush.bf16.msra.mxu0 0
        %684 = vmatpush.bf16.msra.mxu0 0
        %685 = vmatpush.bf16.msra.mxu0 0
        %686 = vmatpush.bf16.msra.mxu0 0
        %687 = vmatpush.bf16.msra.mxu0 %v672
        %688 = vmatmul.bf16.gmra.mxu0 %v669
        %v689 = vpop.f32.mrf.mxu0
        %v690 = vadd.f32 0.0, %v689
        %v691 = vpop.f32.mrf.mxu0
        %692 = vdwg.mxu0
        %693 = vmatpush.bf16.msra.mxu0 0
        %694 = vmatpush.bf16.msra.mxu0 0
        %695 = vmatpush.bf16.msra.mxu0 0
        %696 = vmatpush.bf16.msra.mxu0 0
        %697 = vmatpush.bf16.msra.mxu0 0
        %698 = vmatpush.bf16.msra.mxu0 0
        %699 = vmatpush.bf16.msra.mxu0 0
        %700 = vmatpush.bf16.msra.mxu0 %v675
        %701 = vmatmul.bf16.gmra.mxu0 %v669
        %v702 = vpop.f32.mrf.mxu0
        %v703 = vadd.f32 0.0, %v702
        %v704 = vpop.f32.mrf.mxu0
        %705 = vdwg.mxu0
        %706 = vmatpush.bf16.msra.mxu0 0
        %707 = vmatpush.bf16.msra.mxu0 0
        %708 = vmatpush.bf16.msra.mxu0 0
        %709 = vmatpush.bf16.msra.mxu0 0
        %710 = vmatpush.bf16.msra.mxu0 0
        %711 = vmatpush.bf16.msra.mxu0 0
        %712 = vmatpush.bf16.msra.mxu0 0
        %713 = vmatpush.bf16.msra.mxu0 %v678
        %714 = vmatmul.bf16.gmra.mxu0 %v669
        %v715 = vpop.f32.mrf.mxu0
        %v716 = vadd.f32 0.0, %v715
        %v717 = vpop.f32.mrf.mxu0
        %718 = vdwg.mxu0
        %v719 = vadd.f32 %v651, %v690
        %v720 = vadd.f32 %v652, %v703
        %v721 = vadd.f32 %v653, %v716
        %s722 = scalar_lea.vmem %s1, 32
        %v723 = vld [vmem:[%s722] sm:$0xf]
        %v725 = vsel %vm198, %v723, 0
        %v728 = vsel %vm202, %v182, 0
        %v731 = vsel %vm202, %v183, 0
        %v734 = vsel %vm202, %v184, 0
        %736 = vmatpush.bf16.msra.mxu0 0
        %737 = vmatpush.bf16.msra.mxu0 0
        %738 = vmatpush.bf16.msra.mxu0 0
        %739 = vmatpush.bf16.msra.mxu0 0
        %740 = vmatpush.bf16.msra.mxu0 0
        %741 = vmatpush.bf16.msra.mxu0 0
        %742 = vmatpush.bf16.msra.mxu0 0
        %743 = vmatpush.bf16.msra.mxu0 %v728
        %744 = vmatmul.bf16.gmra.mxu0 %v725
        %v745 = vpop.f32.mrf.mxu0
        %v746 = vadd.f32 0.0, %v745
        %v747 = vpop.f32.mrf.mxu0
        %748 = vdwg.mxu0
        %749 = vmatpush.bf16.msra.mxu0 0
        %750 = vmatpush.bf16.msra.mxu0 0
        %751 = vmatpush.bf16.msra.mxu0 0
        %752 = vmatpush.bf16.msra.mxu0 0
        %753 = vmatpush.bf16.msra.mxu0 0
        %754 = vmatpush.bf16.msra.mxu0 0
        %755 = vmatpush.bf16.msra.mxu0 0
        %756 = vmatpush.bf16.msra.mxu0 %v731
        %757 = vmatmul.bf16.gmra.mxu0 %v725
        %v758 = vpop.f32.mrf.mxu0
        %v759 = vadd.f32 0.0, %v758
        %v760 = vpop.f32.mrf.mxu0
        %761 = vdwg.mxu0
        %762 = vmatpush.bf16.msra.mxu0 0
        %763 = vmatpush.bf16.msra.mxu0 0
        %764 = vmatpush.bf16.msra.mxu0 0
        %765 = vmatpush.bf16.msra.mxu0 0
        %766 = vmatpush.bf16.msra.mxu0 0
        %767 = vmatpush.bf16.msra.mxu0 0
        %768 = vmatpush.bf16.msra.mxu0 0
        %769 = vmatpush.bf16.msra.mxu0 %v734
        %770 = vmatmul.bf16.gmra.mxu0 %v725
        %v771 = vpop.f32.mrf.mxu0
        %v772 = vadd.f32 0.0, %v771
        %v773 = vpop.f32.mrf.mxu0
        %774 = vdwg.mxu0
        %v775 = vadd.f32 %v719, %v746
        %v776 = vadd.f32 %v720, %v759
        %v777 = vadd.f32 %v721, %v772
        %779 = vset.pattern.permute.xlu0 0
        %780 = vperm.xlu0 %779, %v172
        %v781 = vpop.permute.xlu0 %780
        %v783 = vadd.f32 %v775, %v781
        %v784 = vadd.f32 %v776, %v781
        %v785 = vadd.f32 %v777, %v781
        %786 = vst [vmem:[%s163] sm:$0xff] %v783
        %787 = vst [vmem:[%s163 + $0x8] sm:$0xff] %v784
        %788 = vst [vmem:[%s163 + $0x10] sm:$0xff] %v785
        %s789 = scalar_lea.vmem %s163, 24 [#allocation2]
        %790 = vst [vmem:[%s789] sm:$0xff] %v781
        %791 = vst [vmem:[%s789 + $0x8] sm:$0xff] %v781
        %792 = vst [vmem:[%s789 + $0x10] sm:$0xff] %v781
        %s793 = scalar_lea.vmem %s163, 48 [#allocation2]
        %794 = vst [vmem:[%s793] sm:$0xff] %v781
        %795 = vst [vmem:[%s793 + $0x8] sm:$0xff] %v781
        %796 = vst [vmem:[%s793 + $0x10] sm:$0xff] %v781
        %s797 = scalar_lea.vmem %s163, 72 [#allocation2]
        %798 = vst [vmem:[%s797] sm:$0xff] %v781
        %799 = vst [vmem:[%s797 + $0x8] sm:$0xff] %v781
        %800 = vst [vmem:[%s797 + $0x10] sm:$0xff] %v781
        %s801 = sand.u32 %s93, 1
        %s802 = scalar_lea.sflag [#allocation3], %s801
        %s803 = sand.u32 %s93, 1
        %s804 = smul.addr %s803, 96
        %s805 = scalar_lea.vmem [#allocation2], %s804
        // Predicated region
        $region33: #{tpu_custom_call.1} parent=31 // pred_check
          %p806 = pneg %p103
        $region34: #{tpu_custom_call.1} parent=31 // pred_check_branch
          %808 = sbr.rel (%p806) target = $region36
        $region35: #{tpu_custom_call.1} parent=31 // pred_region
          %810 = vsyncadd %s802, 0
          %s811 = smul.addr %s17, 12
          %s812 = smul.addr %s811, 8
          %s813 = scalar_lea.hbm %s3, %s812
          %s814 = sshll.u32 %s805, 4
          %s815 = int_to_ptr.vmem [resolvable:$true] %s814
          %s816 = sshll.u32 %s813, 4
          %s817 = int_to_ptr.hbm [resolvable:$true] %s816
          %822 = dma.vmem_to_hbm [thread:$0]  %s815, 1536, %s817, %s802, 384, 384, 24
        $region36: #{tpu_custom_call.1} parent=31 // pred_fallthru
          _
      $region32: #{tpu_custom_call.1} parent=5 // pred_fallthru
        _
      %p823 = scmp.le.s32.totalorder 2, %s12
      // Predicated region
      $region37: #{tpu_custom_call.1} parent=5 // pred_check
        %p824 = pneg %p823
      $region38: #{tpu_custom_call.1} parent=5 // pred_check_branch
        %826 = sbr.rel (%p824) target = $region40
      $region39: #{tpu_custom_call.1} parent=5 // pred_region
        %s827 = ssub.s32 %s12, 2
        // Predicated region
        $region41: #{tpu_custom_call.1} parent=39 // pred_check
          %p828 = pneg %p109
        $region42: #{tpu_custom_call.1} parent=39 // pred_check_branch
          %830 = sbr.rel (%p828) target = $region44
        $region43: #{tpu_custom_call.1} parent=39 // pred_region
          %s831 = sand.u32 %s94, 1
          %s832 = scalar_lea.sflag [#allocation3], %s831
          %s833 = sand.u32 %s94, 1
          %s834 = smul.addr %s833, 96
          %s835 = scalar_lea.vmem [#allocation2], %s834
          %837 = dma.done %s832, 1536
        $region44: #{tpu_custom_call.1} parent=39 // pred_fallthru
          _
      $region40: #{tpu_custom_call.1} parent=5 // pred_fallthru
        _
    $region6: #{tpu_custom_call.1} parent=1 // loop_footer
      %s16 = sadd.s32 1, %s12
    $region7: #{tpu_custom_call.1} parent=1 // loop_footer_branch
      %11 = sbr.rel target = $region3
    $region8: #{tpu_custom_call.1} parent=1 // loop_exit
      _
    %838 = vsyncpa [#allocation3], 1
    %s839 = scalar_lea.sflag [#allocation3], 1
    %840 = vsyncpa %s839, 1

</llo_original>
